<compile_context>
chip_gen: v7x
topology: tpu7x:2x2x1
jax: 0.10.0
libtpu: 0.0.40
codegen_flags: <defaults>
</compile_context>

<pallas_src>
import jax
import jax.numpy as jnp
from jax.experimental import pallas as pl
from jax.experimental.pallas import tpu as pltpu


def fnn_kernel(x_ref, w1t_ref, w2t_ref, o_ref):
    # x_ref:   (TB, 64)   batch tile of activations
    # w1t_ref: (64, 3)    W_hidden^T (pre-transposed in wrapper)
    # w2t_ref: (3, 10)    W_output^T (pre-transposed in wrapper)
    # o_ref:   (TB, 10)   output tile (narrow; edge block masked by Pallas)
    x = x_ref[...]

    # hidden = relu(x @ W1^T), f32 accumulation on the MXU
    h = jnp.dot(x, w1t_ref[...], preferred_element_type=jnp.float32)
    h = jnp.maximum(h, 0.0)

    # output = h @ W2^T
    y = jnp.dot(h, w2t_ref[...], preferred_element_type=jnp.float32)
    o_ref[...] = y.astype(o_ref.dtype)


def _has_two_tensorcores():
    """Best-effort detection of 2-TensorCore-per-chip TPUs (v4 / v5p / v7x)."""
    try:
        kind = jax.devices()[0].device_kind.lower()
    except Exception:
        return False
    if "lite" in kind or "v5e" in kind or "v6" in kind:
        return False
    return any(tag in kind for tag in ("v4", "v5p", "7x", "v7"))


def minimal_fnn(x, w_hidden, w_output, *, tb=None):
    """x: (B, 64) f32, w_hidden: (3, 64) f32, w_output: (10, 3) f32 -> (B, 10) f32."""
    B, K = x.shape                       # K = 64
    H = w_hidden.shape[0]                # 3
    N = w_output.shape[0]                # 10

    # Wrapper-side layout plumbing (free at XLA level): pre-transpose weights.
    w1t = w_hidden.T.astype(x.dtype)     # (64, 3)
    w2t = w_output.T.astype(x.dtype)     # (3, 10)

    two_cores = _has_two_tensorcores()
    if tb is None:
        tb = 8192 if two_cores else 4096

    # Batch tile: multiple of 8 sublanes, no larger than B rounded up to 8.
    tb_eff = max(8, (min(tb, ((B + 7) // 8) * 8) // 8) * 8)
    grid = (pl.cdiv(B, tb_eff),)         # no explicit pad of x: edge block is masked

    flops = 2 * B * K * H + 2 * B * H * N
    bytes_accessed = (B * (K + N) + K * H + H * N) * x.dtype.itemsize

    batch_sem = pltpu.CORE_PARALLEL if two_cores else "parallel"

    y = pl.pallas_call(
        fnn_kernel,
        out_shape=jax.ShapeDtypeStruct((B, N), x.dtype),
        grid=grid,
        in_specs=[
            pl.BlockSpec((tb_eff, K), lambda i: (i, 0)),   # batch-tiled activations
            pl.BlockSpec((K, H), lambda i: (0, 0)),        # W1^T, VMEM-resident
            pl.BlockSpec((H, N), lambda i: (0, 0)),        # W2^T, VMEM-resident
        ],
        out_specs=pl.BlockSpec((tb_eff, N), lambda i: (i, 0)),
        compiler_params=pltpu.CompilerParams(
            dimension_semantics=(batch_sem,),
        ),
        cost_estimate=pl.CostEstimate(
            flops=flops, transcendentals=0, bytes_accessed=bytes_accessed),
    )(x, w1t, w2t)

    return y


def reference_fnn(x, w_hidden, w_output):
    h = jnp.maximum(x @ w_hidden.T, 0.0)
    return h @ w_output.T


if __name__ == "__main__":
    key = jax.random.PRNGKey(0)
    k_x, k_w1, k_w2 = jax.random.split(key, 3)

    B = 8
    # Deterministic synthetic parameters (PyTorch shapes: Linear(in, out) -> (out, in))
    x = jax.random.normal(k_x, (B, 64), dtype=jnp.float32)
    w_hidden = jax.random.normal(k_w1, (3, 64), dtype=jnp.float32) * 0.1
    w_output = jax.random.normal(k_w2, (10, 3), dtype=jnp.float32) * 0.1

    y = minimal_fnn(x, w_hidden, w_output)
    y = jax.block_until_ready(y)

    y_ref = reference_fnn(x, w_hidden, w_output)
    assert y.shape == (B, 10)
    assert jnp.allclose(y, y_ref, atol=1e-5, rtol=1e-5), "mismatch vs reference"

    # Ragged batch (not a multiple of the tile size) exercises the masked edge block.
    B2 = 20
    x2 = jax.random.normal(k_x, (B2, 64), dtype=jnp.float32)
    y2 = jax.block_until_ready(minimal_fnn(x2, w_hidden, w_output, tb=16))
    assert y2.shape == (B2, 10)
    assert jnp.allclose(y2, reference_fnn(x2, w_hidden, w_output), atol=1e-5, rtol=1e-5)

    print("KERNEL_OK")
</pallas_src>

<mosaic_0001>
module attributes {stable_mosaic.version = 11 : i64} {
  func.func @fnn_kernel(%arg0: i32, %arg1: memref<8x64xf32, #tpu.memory_space<vmem>>, %arg2: memref<64x3xf32, #tpu.memory_space<vmem>>, %arg3: memref<3x10xf32, #tpu.memory_space<vmem>>, %arg4: memref<8x10xf32, #tpu.memory_space<vmem>>) attributes {dimension_semantics = [#tpu.dimension_semantics<parallel>], iteration_bounds = array<i64: 1>, scalar_prefetch = 0 : i64, scratch_operands = 0 : i64, tpu.core_type = #tpu.core_type<tc>, window_params = [{transform_indices = @transform_0, window_bounds = array<i64: 8, 64>}, {pipeline_mode = #tpu.pipeline_mode<synchronous>, transform_indices = @transform_1, window_bounds = array<i64: 64, 3>}, {pipeline_mode = #tpu.pipeline_mode<synchronous>, transform_indices = @transform_2, window_bounds = array<i64: 3, 10>}, {transform_indices = @transform_3, window_bounds = array<i64: 8, 10>}]} {
    %c0 = arith.constant 0 : index
    %c0_0 = arith.constant 0 : index
    %0 = vector.load %arg1[%c0, %c0_0] : memref<8x64xf32, #tpu.memory_space<vmem>>, vector<8x64xf32>
    %c0_1 = arith.constant 0 : index
    %c0_2 = arith.constant 0 : index
    %1 = vector.load %arg2[%c0_1, %c0_2] : memref<64x3xf32, #tpu.memory_space<vmem>>, vector<64x3xf32>
    %cst = arith.constant dense<0.000000e+00> : vector<8x3xf32>
    %2 = tpu.matmul %0, %1, %cst {dimension_numbers = #tpu.dot_dimension_numbers<[1], [0], [0], [1], [0, 0, 1, 1], [], []>} : vector<8x64xf32>, vector<64x3xf32>, vector<8x3xf32> -> vector<8x3xf32>
    %cst_3 = arith.constant 0.000000e+00 : f32
    %3 = vector.broadcast %cst_3 : f32 to vector<8x3xf32>
    %4 = arith.maximumf %2, %3 : vector<8x3xf32>
    %c0_4 = arith.constant 0 : index
    %c0_5 = arith.constant 0 : index
    %5 = vector.load %arg3[%c0_4, %c0_5] : memref<3x10xf32, #tpu.memory_space<vmem>>, vector<3x10xf32>
    %cst_6 = arith.constant dense<0.000000e+00> : vector<8x10xf32>
    %6 = tpu.matmul %4, %5, %cst_6 {dimension_numbers = #tpu.dot_dimension_numbers<[1], [0], [0], [1], [0, 0, 1, 1], [], []>} : vector<8x3xf32>, vector<3x10xf32>, vector<8x10xf32> -> vector<8x10xf32>
    %c0_7 = arith.constant 0 : index
    %c0_8 = arith.constant 0 : index
    %7 = vector.load %arg4[%c0_7, %c0_8] : memref<8x10xf32, #tpu.memory_space<vmem>>, vector<8x10xf32>
    tpu.vector_store %arg4[%c0_7, %c0_8], %6 {strides = array<i32>} : memref<8x10xf32, #tpu.memory_space<vmem>>, vector<8x10xf32>,
    return
  }
  func.func @transform_0(%arg0: i32) -> (i32, i32) {
    %c0_i32 = arith.constant 0 : i32
    %c0_i32_0 = arith.constant 0 : i32
    return %arg0, %c0_i32 : i32, i32
  }
  func.func @transform_1(%arg0: i32) -> (i32, i32) {
    %c0_i32 = arith.constant 0 : i32
    %c0_i32_0 = arith.constant 0 : i32
    %c0_i32_1 = arith.constant 0 : i32
    return %c0_i32, %c0_i32_0 : i32, i32
  }
  func.func @transform_2(%arg0: i32) -> (i32, i32) {
    %c0_i32 = arith.constant 0 : i32
    %c0_i32_0 = arith.constant 0 : i32
    %c0_i32_1 = arith.constant 0 : i32
    return %c0_i32, %c0_i32_0 : i32, i32
  }
  func.func @transform_3(%arg0: i32) -> (i32, i32) {
    %c0_i32 = arith.constant 0 : i32
    %c0_i32_0 = arith.constant 0 : i32
    return %arg0, %c0_i32 : i32, i32
  }
}

</mosaic_0001>

<llo_original>
// kernel: tpu_custom_call.1
$region0: #{tpu_custom_call.1}
  #allocation0 [shape = 'u32[]', space=smem, size = 0x4, offset = 0x4, fixed_abs, tag = 'smem constant byte address 0x4 - core index']
  #allocation1 [shape = 'u32[144,128]{1,0:T(1,128)}', space=vmem, size = 0x12000, scoped, tag = 'internal scratch']
  %s0 = inlined_call_operand.vmem [shape: f32[8,64], index: 0, kind: input, shape index: {}]
  %s1 = inlined_call_operand.vmem [shape: f32[64,3], index: 1, kind: input, shape index: {}]
  %s2 = inlined_call_operand.vmem [shape: f32[3,10], index: 2, kind: input, shape index: {}]
  %s3 = inlined_call_operand.hbm [shape: f32[8,10], index: 3, kind: output, shape index: {}]
  %s4 = sld [smem:[#allocation0]]
  $region22: #{tpu_custom_call.1} parent=0
    _
  %s6 = ssub.s32 1, %s4
  %s7 = scalar_select 0, %s6, %s4
  $region1: #{tpu_custom_call.1} parent=0
    #allocation2 [shape = 'u8[4096]{0}', space=vmem, size = 0x1000, scoped, tag = 'output window, operand 0, single buffered']
    #allocation3 [shape = 's32[1]{0}', space=sflag, size = 0x4, scoped, tag = 'scoped memory for tpu_custom_call.1']
    %8 = vsyncpa [#allocation3], 0
    // Predicated region
    $region2: #{tpu_custom_call.1} parent=1 // pred_check
      _
    $region3: #{tpu_custom_call.1} parent=1 // pred_check_branch
      %10 = sbr.rel (0) target = $region5
    $region4: #{tpu_custom_call.1} parent=1 // pred_region
      _
    $region5: #{tpu_custom_call.1} parent=1 // pred_fallthru
      _
    // Predicated region
    $region6: #{tpu_custom_call.1} parent=1 // pred_check
      _
    $region7: #{tpu_custom_call.1} parent=1 // pred_check_branch
      %12 = sbr.rel (0) target = $region9
    $region8: #{tpu_custom_call.1} parent=1 // pred_region
      _
    $region9: #{tpu_custom_call.1} parent=1 // pred_fallthru
      _
    // Predicated region
    $region10: #{tpu_custom_call.1} parent=1 // pred_check
      _
    $region11: #{tpu_custom_call.1} parent=1 // pred_check_branch
      %14 = sbr.rel (0) target = $region13
    $region12: #{tpu_custom_call.1} parent=1 // pred_region
      _
    $region13: #{tpu_custom_call.1} parent=1 // pred_fallthru
      _
    %v15 = vld [vmem:[%s0] sm:$0xff]
    %v16 = vld [vmem:[%s1] sm:$0xff]
    %v17 = vld [vmem:[%s1 + $0x8] sm:$0xff]
    %v18 = vld [vmem:[%s1 + $0x10] sm:$0xff]
    %v19 = vld [vmem:[%s1 + $0x18] sm:$0xff]
    %v20 = vld [vmem:[%s1 + $0x20] sm:$0xff]
    %v21 = vld [vmem:[%s1 + $0x28] sm:$0xff]
    %v22 = vld [vmem:[%s1 + $0x30] sm:$0xff]
    %v23 = vld [vmem:[%s1 + $0x38] sm:$0xff]
    %vm24 = vcmask 523264
    %v26 = vsel %vm24, %v15, 0
    %28 = vmatprep.subr.mxu0 0.0
    %29 = vmatpush1.msra.mxu0 %v16
    %30 = vmatprep.subr.mxu0 0.0
    %31 = vmatpush1.msra.mxu0 %v17
    %32 = vmatprep.subr.mxu0 0.0
    %33 = vmatpush1.msra.mxu0 %v18
    %34 = vmatprep.subr.mxu0 0.0
    %35 = vmatpush1.msra.mxu0 %v19
    %36 = vmatprep.subr.mxu0 0.0
    %37 = vmatpush1.msra.mxu0 %v20
    %38 = vmatprep.subr.mxu0 0.0
    %39 = vmatpush1.msra.mxu0 %v21
    %40 = vmatprep.subr.mxu0 0.0
    %41 = vmatpush1.msra.mxu0 %v22
    %42 = vmatprep.subr.mxu0 0.0
    %43 = vmatpush1.msra.mxu0 %v23
    %44 = vmatprep.subr.mxu0 0.0
    %45 = vmatpush1.msra.mxu0 0.0
    %46 = vmatprep.subr.mxu0 0.0
    %47 = vmatpush1.msra.mxu0 0.0
    %48 = vmatprep.subr.mxu0 0.0
    %49 = vmatpush1.msra.mxu0 0.0
    %50 = vmatprep.subr.mxu0 0.0
    %51 = vmatpush1.msra.mxu0 0.0
    %52 = vmatprep.subr.mxu0 0.0
    %53 = vmatpush1.msra.mxu0 0.0
    %54 = vmatprep.subr.mxu0 0.0
    %55 = vmatpush1.msra.mxu0 0.0
    %56 = vmatprep.subr.mxu0 0.0
    %57 = vmatpush1.msra.mxu0 0.0
    %58 = vmatprep.subr.mxu0 0.0
    %59 = vmatpush1.msra.mxu0 0.0
    %60 = vmatprep.subr.mxu0 0.0
    %61 = vmatpush1.msra.mxu0 0.0
    %62 = vmatprep.subr.mxu0 0.0
    %63 = vmatpush1.msra.mxu0 0.0
    %64 = vmatprep.subr.mxu0 0.0
    %65 = vmatpush1.msra.mxu0 0.0
    %66 = vmatprep.subr.mxu0 0.0
    %67 = vmatpush1.msra.mxu0 0.0
    %68 = vmatprep.subr.mxu0 0.0
    %69 = vmatpush1.msra.mxu0 0.0
    %70 = vmatprep.subr.mxu0 0.0
    %71 = vmatpush1.msra.mxu0 0.0
    %72 = vmatprep.subr.mxu0 0.0
    %73 = vmatpush1.msra.mxu0 0.0
    %74 = vmatprep.subr.mxu0 0.0
    %75 = vmatpush1.msra.mxu0 0.0
    %76 = vmatprep.subr.mxu0 0.0
    %77 = vmatpush1.msra.mxu0 0.0
    %78 = vmatprep.subr.mxu0 0.0
    %79 = vmatpush1.msra.mxu0 0.0
    %80 = vmatprep.subr.mxu0 0.0
    %81 = vmatpush1.msra.mxu0 0.0
    %82 = vmatprep.subr.mxu0 0.0
    %83 = vmatpush1.msra.mxu0 0.0
    %84 = vmatprep.subr.mxu0 0.0
    %85 = vmatpush1.msra.mxu0 0.0
    %86 = vmatprep.subr.mxu0 0.0
    %87 = vmatpush1.msra.mxu0 0.0
    %88 = vmatprep.subr.mxu0 0.0
    %89 = vmatpush1.msra.mxu0 0.0
    %90 = vmatprep.subr.mxu0 0.0
    %91 = vmatpush1.msra.mxu0 0.0
    %92 = vmatprep.mubr.f32.mxu0 0.0
    %93 = vmatmul.mubr.f32.gmra.mrb[0].mxu0 %v26
    %v94 = vpop.f32.mrb[0].mxu0
    %v95 = vadd.f32 0.0, %v94
    %v96 = vpop.f32.mrb[0].mxu0
    %97 = vdwg.mxu0
    %v98 = vmax.f32 %v95, 0.0
    %v99 = vld [vmem:[%s2] sm:$0x7]
    %vm100 = vcmask 23552
    %v102 = vsel %vm100, %v98, 0
    %vm104 = vcmask 1042432
    %v106 = vsel %vm104, %v99, 0
    %108 = vmatprep.subr.mxu0 0.0
    %109 = vmatpush1.msra.mxu0 %v106
    %110 = vmatprep.subr.mxu0 0.0
    %111 = vmatpush1.msra.mxu0 0.0
    %112 = vmatprep.subr.mxu0 0.0
    %113 = vmatpush1.msra.mxu0 0.0
    %114 = vmatprep.subr.mxu0 0.0
    %115 = vmatpush1.msra.mxu0 0.0
    %116 = vmatprep.subr.mxu0 0.0
    %117 = vmatpush1.msra.mxu0 0.0
    %118 = vmatprep.subr.mxu0 0.0
    %119 = vmatpush1.msra.mxu0 0.0
    %120 = vmatprep.subr.mxu0 0.0
    %121 = vmatpush1.msra.mxu0 0.0
    %122 = vmatprep.subr.mxu0 0.0
    %123 = vmatpush1.msra.mxu0 0.0
    %124 = vmatprep.subr.mxu0 0.0
    %125 = vmatpush1.msra.mxu0 0.0
    %126 = vmatprep.subr.mxu0 0.0
    %127 = vmatpush1.msra.mxu0 0.0
    %128 = vmatprep.subr.mxu0 0.0
    %129 = vmatpush1.msra.mxu0 0.0
    %130 = vmatprep.subr.mxu0 0.0
    %131 = vmatpush1.msra.mxu0 0.0
    %132 = vmatprep.subr.mxu0 0.0
    %133 = vmatpush1.msra.mxu0 0.0
    %134 = vmatprep.subr.mxu0 0.0
    %135 = vmatpush1.msra.mxu0 0.0
    %136 = vmatprep.subr.mxu0 0.0
    %137 = vmatpush1.msra.mxu0 0.0
    %138 = vmatprep.subr.mxu0 0.0
    %139 = vmatpush1.msra.mxu0 0.0
    %140 = vmatprep.subr.mxu0 0.0
    %141 = vmatpush1.msra.mxu0 0.0
    %142 = vmatprep.subr.mxu0 0.0
    %143 = vmatpush1.msra.mxu0 0.0
    %144 = vmatprep.subr.mxu0 0.0
    %145 = vmatpush1.msra.mxu0 0.0
    %146 = vmatprep.subr.mxu0 0.0
    %147 = vmatpush1.msra.mxu0 0.0
    %148 = vmatprep.subr.mxu0 0.0
    %149 = vmatpush1.msra.mxu0 0.0
    %150 = vmatprep.subr.mxu0 0.0
    %151 = vmatpush1.msra.mxu0 0.0
    %152 = vmatprep.subr.mxu0 0.0
    %153 = vmatpush1.msra.mxu0 0.0
    %154 = vmatprep.subr.mxu0 0.0
    %155 = vmatpush1.msra.mxu0 0.0
    %156 = vmatprep.subr.mxu0 0.0
    %157 = vmatpush1.msra.mxu0 0.0
    %158 = vmatprep.subr.mxu0 0.0
    %159 = vmatpush1.msra.mxu0 0.0
    %160 = vmatprep.subr.mxu0 0.0
    %161 = vmatpush1.msra.mxu0 0.0
    %162 = vmatprep.subr.mxu0 0.0
    %163 = vmatpush1.msra.mxu0 0.0
    %164 = vmatprep.subr.mxu0 0.0
    %165 = vmatpush1.msra.mxu0 0.0
    %166 = vmatprep.subr.mxu0 0.0
    %167 = vmatpush1.msra.mxu0 0.0
    %168 = vmatprep.subr.mxu0 0.0
    %169 = vmatpush1.msra.mxu0 0.0
    %170 = vmatprep.subr.mxu0 0.0
    %171 = vmatpush1.msra.mxu0 0.0
    %172 = vmatprep.mubr.f32.mxu0 0.0
    %173 = vmatmul.mubr.f32.gmra.mrb[0].mxu0 %v102
    %v174 = vpop.f32.mrb[0].mxu0
    %v175 = vadd.f32 0.0, %v174
    %v176 = vpop.f32.mrb[0].mxu0
    %177 = vdwg.mxu0
    %vm178 = vcmask 80896
    %179 = vst.msk [vmem:[#allocation2] sm:$0xff] %vm178, %v175
    // Predicated region
    $region14: #{tpu_custom_call.1} parent=1 // pred_check
      _
    $region15: #{tpu_custom_call.1} parent=1 // pred_check_branch
      %181 = sbr.rel (0) target = $region17
    $region16: #{tpu_custom_call.1} parent=1 // pred_region
      %s183 = ssub.s32 128, 128
      %184 = vsyncadd [#allocation3], %s183
      %s186 = sshll.u32 [#allocation2], 4
      %s187 = int_to_ptr.vmem [resolvable:$true] %s186
      %189 = dma.vmem_to_hbm [thread:$0]  %s187, 128, %s3, [#allocation3]
    $region17: #{tpu_custom_call.1} parent=1 // pred_fallthru
      _
    // Predicated region
    $region18: #{tpu_custom_call.1} parent=1 // pred_check
      _
    $region19: #{tpu_custom_call.1} parent=1 // pred_check_branch
      %191 = sbr.rel (0) target = $region21
    $region20: #{tpu_custom_call.1} parent=1 // pred_region
      %192 = dma.done [#allocation3], 128
    $region21: #{tpu_custom_call.1} parent=1 // pred_fallthru
      _
    %193 = vsyncpa [#allocation3], 1

</llo_original>
